<compile_context>
chip_gen: v5e
topology: v5e:2x2
jax: 0.10.0
libtpu: 0.0.40
codegen_flags: <defaults>
</compile_context>

<pallas_src>
import functools

import jax
import jax.numpy as jnp
from jax import lax
from jax.experimental import pallas as pl
from jax.experimental.pallas import tpu as pltpu

LANES = 128            # vreg lane width
MAX_TILE_ROWS = 4096   # (4096, 128) f32 tile = 2 MiB per input per buffer


def _round_up(a, b):
    return -(-a // b) * b


def _num_tensorcores() -> int:
    """Best-effort TensorCores-per-device (2 on v7x, 1 on v5e/v6e)."""
    try:
        info = pltpu.get_tpu_info()
    except Exception:
        info = None
    if info is not None:
        for name in ("num_cores", "num_tensorcores", "tensorcore_count",
                     "num_cores_per_chip", "core_count"):
            v = getattr(info, name, None)
            try:
                v = int(v)
            except (TypeError, ValueError):
                continue
            if v > 0:
                return max(1, min(2, v))
    try:
        if "v7" in jax.devices()[0].device_kind.lower():
            return 2
    except Exception:
        pass
    return 1


def _bce_blur_kernel(x_ref, t_ref, o_ref, acc_ref, *,
                     inv_alpha, tile_rows, steps, n_valid, masked, sharded):
    """One (tile_rows, LANES) tile: fused elementwise loss + vreg partial sums."""
    if sharded:
        c = pl.program_id(0)          # TensorCore shard axis
        i = pl.program_id(1)          # reduction axis within a shard
    else:
        c = 0
        i = pl.program_id(0)

    @pl.when(i == 0)
    def _():
        acc_ref[...] = jnp.zeros_like(acc_ref)

    x = x_ref[...].astype(jnp.float32)
    t = t_ref[...].astype(jnp.float32)

    # Numerically stable BCE-with-logits:
    #   loss = max(x, 0) - x*t + log1p(exp(-|x|))
    # e = exp(-|x|) is reused to build sigmoid(x) without a second exp.
    e = jnp.exp(-jnp.abs(x))
    loss = jnp.maximum(x, 0.0) - x * t + jnp.log1p(e)

    # sigmoid(|x|) = 1/(1+e): EUP vrcp seed + one Newton step (keeps the divide
    # off the VALU slots while staying accurate to ~f32 level).
    d = 1.0 + e
    r = pl.reciprocal(d, approx=True)
    s = r * (2.0 - d * r)
    p = jnp.where(x >= 0.0, s, 1.0 - s)         # sigmoid(x)
    loss = loss * (1.0 - jnp.exp((p - t - 1.0) * inv_alpha))

    def accumulate(v):
        # Fold tile into 4 independent vreg-shaped partial sums: pure VPU adds
        # with 4-way ILP; no cross-lane/sublane reduce on the steady-state path.
        acc_ref[...] += jnp.sum(v.reshape(tile_rows // 32, 4, 8, LANES), axis=0)

    if masked:
        full_rows = n_valid // LANES        # static Python ints
        tail = n_valid % LANES
        tile_idx = c * steps + i            # global tile index (scalar)
        needs_mask = (tile_idx + 1) * tile_rows > full_rows

        @pl.when(needs_mask)
        def _():
            start_row = tile_idx * tile_rows
            row = start_row + lax.broadcasted_iota(jnp.int32, (tile_rows, LANES), 0)
            col = lax.broadcasted_iota(jnp.int32, (tile_rows, LANES), 1)
            keep = jnp.logical_or(row < full_rows,
                                  jnp.logical_and(row == full_rows, col < tail))
            accumulate(jnp.where(keep, loss, 0.0))

        @pl.when(jnp.logical_not(needs_mask))
        def _():
            accumulate(loss)
    else:
        accumulate(loss)

    @pl.when(i == steps - 1)
    def _():
        # Single cross-lane reduce per shard, off the steady-state path.
        folded = jnp.sum(acc_ref[...], axis=0)                    # (8, LANES)
        o_ref[...] = jnp.sum(folded, axis=(0, 1), keepdims=True)  # (1, 1)


def bce_blur_with_logits_loss(pred, true, alpha=0.05):
    """Mean of BCE-with-logits * blur factor, matching the PyTorch module."""
    assert pred.shape == true.shape
    n = pred.size
    inv_alpha = 1.0 / (float(alpha) + 0.0001)

    x = pred.reshape(-1)
    t = true.reshape(-1)

    # Lane-dense layout: rows of 128 lanes. Only pad (a copy) when strictly
    # required: n not lane-aligned, or the whole tensor is tiny (<32 rows).
    rows_needed = -(-n // LANES)
    if rows_needed < 32:
        rows = 32
    elif n % LANES:
        rows = _round_up(rows_needed, 8)    # <= 1023 extra elements
    else:
        rows = rows_needed                  # zero-copy path
    padded_n = rows * LANES
    if padded_n != n:
        x = jnp.pad(x, (0, padded_n - n))
        t = jnp.pad(t, (0, padded_n - n))
    x = x.reshape(rows, LANES)
    t = t.reshape(rows, LANES)

    # Tile rows: multiple of 32 (for the (4,8,128) accumulator fold), <= rows.
    tile_rows = min(MAX_TILE_ROWS, (rows // 32) * 32)

    # Shard rows across TensorCores only when the chip actually has >1 (v7x)
    # and there is enough work; otherwise keep the grid 1-D (v5e/v6e).
    num_cores = _num_tensorcores()
    num_shards = num_cores if (num_cores > 1 and rows >= num_cores * tile_rows) else 1
    steps = -(-rows // (num_shards * tile_rows))
    covered = num_shards * steps * tile_rows * LANES
    masked = covered != n                   # any overhang (pad / partial block)

    kernel = functools.partial(
        _bce_blur_kernel,
        inv_alpha=inv_alpha,
        tile_rows=tile_rows,
        steps=steps,
        n_valid=n,
        masked=masked,
        sharded=(num_shards > 1),
    )

    def in_spec():
        if num_shards > 1:
            return pl.BlockSpec((tile_rows, LANES),
                                lambda c, i, s=steps: (c * s + i, 0))
        return pl.BlockSpec((tile_rows, LANES), lambda i: (i, 0))

    if num_shards > 1:
        grid = (num_shards, steps)
        out_spec = pl.BlockSpec((1, 1), lambda c, i: (c, 0))
        dim_sem = (pltpu.CORE_PARALLEL, pltpu.ARBITRARY)
    else:
        grid = (steps,)
        out_spec = pl.BlockSpec((1, 1), lambda i: (0, 0))
        dim_sem = ("arbitrary",)

    partial_sums = pl.pallas_call(
        kernel,
        out_shape=jax.ShapeDtypeStruct((num_shards, 1), jnp.float32),
        grid_spec=pltpu.PrefetchScalarGridSpec(
            num_scalar_prefetch=0,
            grid=grid,
            in_specs=[in_spec(), in_spec()],
            out_specs=out_spec,
            scratch_shapes=[pltpu.VMEM((4, 8, LANES), jnp.float32)],
        ),
        compiler_params=pltpu.CompilerParams(dimension_semantics=dim_sem),
    )(x, t)

    return jnp.sum(partial_sums) / jnp.float32(n)


def _reference(pred, true, alpha=0.05):
    x = pred.astype(jnp.float32)
    t = true.astype(jnp.float32)
    loss = jnp.maximum(x, 0.0) - x * t + jnp.log1p(jnp.exp(-jnp.abs(x)))
    p = jax.nn.sigmoid(x)
    dx = p - t
    af = 1.0 - jnp.exp((dx - 1.0) / (alpha + 0.0001))
    return jnp.mean(loss * af)


if __name__ == "__main__":
    key = jax.random.PRNGKey(0)
    k1, k2, k3, k4, k5, k6 = jax.random.split(key, 6)

    # NCHW-shaped logits and targets (elementwise loss -> layout-agnostic).
    pred = jax.random.normal(k1, (2, 4, 16, 16), dtype=jnp.float32)
    true = (jax.random.uniform(k2, (2, 4, 16, 16)) > 0.5).astype(jnp.float32)
    out = jax.block_until_ready(bce_blur_with_logits_loss(pred, true, alpha=0.05))
    ref = _reference(pred, true, alpha=0.05)
    assert jnp.allclose(out, ref, rtol=1e-5, atol=1e-6), (out, ref)

    # Unaligned case (forces lane-tail + pad masking).
    pred2 = jax.random.normal(k3, (3, 5, 33, 17), dtype=jnp.float32)
    true2 = (jax.random.uniform(k4, (3, 5, 33, 17)) > 0.5).astype(jnp.float32)
    out2 = jax.block_until_ready(bce_blur_with_logits_loss(pred2, true2))
    ref2 = _reference(pred2, true2)
    assert jnp.allclose(out2, ref2, rtol=1e-5, atol=1e-6), (out2, ref2)

    # Multi-tile case with a partial trailing block (no full-array pad copy).
    pred3 = jax.random.normal(k5, (641, 999), dtype=jnp.float32)
    true3 = (jax.random.uniform(k6, (641, 999)) > 0.5).astype(jnp.float32)
    out3 = jax.block_until_ready(bce_blur_with_logits_loss(pred3, true3))
    ref3 = _reference(pred3, true3)
    assert jnp.allclose(out3, ref3, rtol=1e-4, atol=1e-6), (out3, ref3)

    print("KERNEL_OK")
</pallas_src>

<mosaic_0001>
module attributes {stable_mosaic.version = 11 : i64} {
  func.func @_bce_blur_kernel(%arg0: i32, %arg1: memref<32x128xf32, #tpu.memory_space<vmem>>, %arg2: memref<32x128xf32, #tpu.memory_space<vmem>>, %arg3: memref<1x1xf32, #tpu.memory_space<vmem>>, %arg4: memref<4x8x128xf32, #tpu.memory_space<vmem>>) attributes {dimension_semantics = [#tpu.dimension_semantics<arbitrary>], iteration_bounds = array<i64: 1>, scalar_prefetch = 0 : i64, scratch_operands = 1 : i64, tpu.core_type = #tpu.core_type<tc>, window_params = [{transform_indices = @transform_0, window_bounds = array<i64: 32, 128>}, {transform_indices = @transform_1, window_bounds = array<i64: 32, 128>}, {pipeline_mode = #tpu.pipeline_mode<synchronous>, transform_indices = @transform_2, window_bounds = array<i64: 1, 1>}]} {
    %c0_i32 = arith.constant 0 : i32
    %0 = arith.cmpi eq, %arg0, %c0_i32 : i32
    %1 = arith.extui %0 : i1 to i32
    %c0_i32_0 = arith.constant 0 : i32
    %2 = arith.cmpi ne, %1, %c0_i32_0 : i32
    scf.if %2 {
      %cst_17 = arith.constant 0.000000e+00 : f32
      %48 = vector.broadcast %cst_17 : f32 to vector<4x8x128xf32>
      %c0_18 = arith.constant 0 : index
      %c0_19 = arith.constant 0 : index
      %c0_20 = arith.constant 0 : index
      %49 = vector.load %arg4[%c0_18, %c0_19, %c0_20] : memref<4x8x128xf32, #tpu.memory_space<vmem>>, vector<4x8x128xf32>
      tpu.vector_store %arg4[%c0_18, %c0_19, %c0_20], %48 {strides = array<i32>} : memref<4x8x128xf32, #tpu.memory_space<vmem>>, vector<4x8x128xf32>,
    } else {
    }
    %c0 = arith.constant 0 : index
    %c0_1 = arith.constant 0 : index
    %3 = vector.load %arg1[%c0, %c0_1] : memref<32x128xf32, #tpu.memory_space<vmem>>, vector<32x128xf32>
    %c0_2 = arith.constant 0 : index
    %c0_3 = arith.constant 0 : index
    %4 = vector.load %arg2[%c0_2, %c0_3] : memref<32x128xf32, #tpu.memory_space<vmem>>, vector<32x128xf32>
    %5 = math.absf %3 : vector<32x128xf32>
    %cst = arith.constant 0.000000e+00 : f32
    %6 = vector.broadcast %cst : f32 to vector<32x128xf32>
    %7 = arith.subf %6, %5 : vector<32x128xf32>
    %8 = math.exp %7 : vector<32x128xf32>
    %cst_4 = arith.constant 0.000000e+00 : f32
    %9 = vector.broadcast %cst_4 : f32 to vector<32x128xf32>
    %10 = arith.maximumf %3, %9 : vector<32x128xf32>
    %11 = arith.mulf %3, %4 : vector<32x128xf32>
    %12 = arith.subf %10, %11 : vector<32x128xf32>
    %13 = math.log1p %8 : vector<32x128xf32>
    %14 = arith.addf %12, %13 : vector<32x128xf32>
    %cst_5 = arith.constant 1.000000e+00 : f32
    %15 = vector.broadcast %cst_5 : f32 to vector<32x128xf32>
    %16 = arith.addf %15, %8 : vector<32x128xf32>
    %17 = tpu.reciprocal %16 {approx = true} : vector<32x128xf32> -> vector<32x128xf32>
    %18 = arith.mulf %16, %17 : vector<32x128xf32>
    %cst_6 = arith.constant 2.000000e+00 : f32
    %19 = vector.broadcast %cst_6 : f32 to vector<32x128xf32>
    %20 = arith.subf %19, %18 : vector<32x128xf32>
    %21 = arith.mulf %17, %20 : vector<32x128xf32>
    %cst_7 = arith.constant 0.000000e+00 : f32
    %22 = vector.broadcast %cst_7 : f32 to vector<32x128xf32>
    %23 = arith.cmpf oge, %3, %22 : vector<32x128xf32>
    %cst_8 = arith.constant 1.000000e+00 : f32
    %24 = vector.broadcast %cst_8 : f32 to vector<32x128xf32>
    %25 = arith.subf %24, %21 : vector<32x128xf32>
    %26 = arith.select %23, %21, %25 : vector<32x128xi1>, vector<32x128xf32>
    %27 = arith.subf %26, %4 : vector<32x128xf32>
    %cst_9 = arith.constant 1.000000e+00 : f32
    %28 = vector.broadcast %cst_9 : f32 to vector<32x128xf32>
    %29 = arith.subf %27, %28 : vector<32x128xf32>
    %cst_10 = arith.constant 19.9600792 : f32
    %30 = vector.broadcast %cst_10 : f32 to vector<32x128xf32>
    %31 = arith.mulf %29, %30 : vector<32x128xf32>
    %32 = math.exp %31 : vector<32x128xf32>
    %cst_11 = arith.constant 1.000000e+00 : f32
    %33 = vector.broadcast %cst_11 : f32 to vector<32x128xf32>
    %34 = arith.subf %33, %32 : vector<32x128xf32>
    %35 = arith.mulf %14, %34 : vector<32x128xf32>
    %c0_i32_12 = arith.constant 0 : i32
    %36 = arith.addi %c0_i32_12, %arg0 : i32
    %c1_i32 = arith.constant 1 : i32
    %37 = arith.addi %36, %c1_i32 : i32
    %c32_i32 = arith.constant 32 : i32
    %38 = arith.muli %37, %c32_i32 : i32
    %c16_i32 = arith.constant 16 : i32
    %39 = arith.cmpi sgt, %38, %c16_i32 : i32
    %40 = arith.extui %39 : i1 to i32
    %c0_i32_13 = arith.constant 0 : i32
    %41 = arith.cmpi ne, %40, %c0_i32_13 : i32
    scf.if %41 {
      %c32_i32_17 = arith.constant 32 : i32
      %48 = arith.muli %36, %c32_i32_17 : i32
      %49 = tpu.iota {dimensions = array<i32: 0>} : vector<32x128xi32>
      %50 = vector.broadcast %48 : i32 to vector<32x128xi32>
      %51 = arith.addi %50, %49 : vector<32x128xi32>
      %52 = tpu.iota {dimensions = array<i32: 1>} : vector<32x128xi32>
      %c16_i32_18 = arith.constant 16 : i32
      %53 = vector.broadcast %c16_i32_18 : i32 to vector<32x128xi32>
      %54 = arith.cmpi slt, %51, %53 : vector<32x128xi32>
      %c16_i32_19 = arith.constant 16 : i32
      %55 = vector.broadcast %c16_i32_19 : i32 to vector<32x128xi32>
      %56 = arith.cmpi eq, %51, %55 : vector<32x128xi32>
      %c0_i32_20 = arith.constant 0 : i32
      %57 = vector.broadcast %c0_i32_20 : i32 to vector<32x128xi32>
      %58 = arith.cmpi slt, %52, %57 : vector<32x128xi32>
      %59 = arith.andi %56, %58 : vector<32x128xi1>
      %60 = arith.ori %54, %59 : vector<32x128xi1>
      %cst_21 = arith.constant 0.000000e+00 : f32
      %61 = vector.broadcast %cst_21 : f32 to vector<32x128xf32>
      %62 = arith.select %60, %35, %61 : vector<32x128xi1>, vector<32x128xf32>
      %c0_22 = arith.constant 0 : index
      %c0_23 = arith.constant 0 : index
      %c0_24 = arith.constant 0 : index
      %63 = vector.load %arg4[%c0_22, %c0_23, %c0_24] : memref<4x8x128xf32, #tpu.memory_space<vmem>>, vector<4x8x128xf32>
      %64 = vector.shape_cast %62 : vector<32x128xf32> to vector<1x4x8x128xf32>
      %cst_25 = arith.constant dense<0.000000e+00> : vector<4x8x128xf32>
      %65 = vector.multi_reduction <add>, %64, %cst_25 [0] : vector<1x4x8x128xf32> to vector<4x8x128xf32>
      %66 = arith.addf %63, %65 : vector<4x8x128xf32>
      %c0_26 = arith.constant 0 : index
      %c0_27 = arith.constant 0 : index
      %c0_28 = arith.constant 0 : index
      %67 = vector.load %arg4[%c0_26, %c0_27, %c0_28] : memref<4x8x128xf32, #tpu.memory_space<vmem>>, vector<4x8x128xf32>
      tpu.vector_store %arg4[%c0_26, %c0_27, %c0_28], %66 {strides = array<i32>} : memref<4x8x128xf32, #tpu.memory_space<vmem>>, vector<4x8x128xf32>,
    } else {
    }
    %true = arith.constant true
    %42 = arith.xori %39, %true : i1
    %43 = arith.extui %42 : i1 to i32
    %c0_i32_14 = arith.constant 0 : i32
    %44 = arith.cmpi ne, %43, %c0_i32_14 : i32
    scf.if %44 {
      %c0_17 = arith.constant 0 : index
      %c0_18 = arith.constant 0 : index
      %c0_19 = arith.constant 0 : index
      %48 = vector.load %arg4[%c0_17, %c0_18, %c0_19] : memref<4x8x128xf32, #tpu.memory_space<vmem>>, vector<4x8x128xf32>
      %49 = vector.shape_cast %35 : vector<32x128xf32> to vector<1x4x8x128xf32>
      %cst_20 = arith.constant dense<0.000000e+00> : vector<4x8x128xf32>
      %50 = vector.multi_reduction <add>, %49, %cst_20 [0] : vector<1x4x8x128xf32> to vector<4x8x128xf32>
      %51 = arith.addf %48, %50 : vector<4x8x128xf32>
      %c0_21 = arith.constant 0 : index
      %c0_22 = arith.constant 0 : index
      %c0_23 = arith.constant 0 : index
      %52 = vector.load %arg4[%c0_21, %c0_22, %c0_23] : memref<4x8x128xf32, #tpu.memory_space<vmem>>, vector<4x8x128xf32>
      tpu.vector_store %arg4[%c0_21, %c0_22, %c0_23], %51 {strides = array<i32>} : memref<4x8x128xf32, #tpu.memory_space<vmem>>, vector<4x8x128xf32>,
    } else {
    }
    %c0_i32_15 = arith.constant 0 : i32
    %45 = arith.cmpi eq, %arg0, %c0_i32_15 : i32
    %46 = arith.extui %45 : i1 to i32
    %c0_i32_16 = arith.constant 0 : i32
    %47 = arith.cmpi ne, %46, %c0_i32_16 : i32
    scf.if %47 {
      %c0_17 = arith.constant 0 : index
      %c0_18 = arith.constant 0 : index
      %c0_19 = arith.constant 0 : index
      %48 = vector.load %arg4[%c0_17, %c0_18, %c0_19] : memref<4x8x128xf32, #tpu.memory_space<vmem>>, vector<4x8x128xf32>
      %cst_20 = arith.constant dense<0.000000e+00> : vector<8x128xf32>
      %49 = vector.multi_reduction <add>, %48, %cst_20 [0] : vector<4x8x128xf32> to vector<8x128xf32>
      %50 = vector.shape_cast %49 : vector<8x128xf32> to vector<1x8x128xf32>
      %cst_21 = arith.constant dense<0.000000e+00> : vector<1xf32>
      %51 = vector.multi_reduction <add>, %50, %cst_21 [1, 2] : vector<1x8x128xf32> to vector<1xf32>
      %52 = vector.shape_cast %51 : vector<1xf32> to vector<1x1x1xf32>
      %53 = vector.extract %52[0, 0, 0] : f32 from vector<1x1x1xf32>
      %54 = vector.broadcast %53 : f32 to vector<1x1xf32>
      %c0_22 = arith.constant 0 : index
      %c0_23 = arith.constant 0 : index
      %55 = vector.load %arg3[%c0_22, %c0_23] : memref<1x1xf32, #tpu.memory_space<vmem>>, vector<1x1xf32>
      tpu.vector_store %arg3[%c0_22, %c0_23], %54 {strides = array<i32>} : memref<1x1xf32, #tpu.memory_space<vmem>>, vector<1x1xf32>,
    } else {
    }
    return
  }
  func.func @transform_0(%arg0: i32) -> (i32, i32) {
    %c0_i32 = arith.constant 0 : i32
    %c0_i32_0 = arith.constant 0 : i32
    return %arg0, %c0_i32 : i32, i32
  }
  func.func @transform_1(%arg0: i32) -> (i32, i32) {
    %c0_i32 = arith.constant 0 : i32
    %c0_i32_0 = arith.constant 0 : i32
    return %arg0, %c0_i32 : i32, i32
  }
  func.func @transform_2(%arg0: i32) -> (i32, i32) {
    %c0_i32 = arith.constant 0 : i32
    %c0_i32_0 = arith.constant 0 : i32
    %c0_i32_1 = arith.constant 0 : i32
    return %c0_i32, %c0_i32_0 : i32, i32
  }
}

</mosaic_0001>

<llo_original>
// kernel: tpu_custom_call.1
$region0: #{tpu_custom_call.1}
  #allocation0 [shape = 'u32[]', space=smem, size = 0x4, offset = 0x4, fixed_abs, tag = 'smem constant byte address 0x4 - core index']
  #allocation1 [shape = 'u32[72,128]{1,0:T(1,128)}', space=vmem, size = 0x9000, scoped, tag = 'internal scratch']
  #allocation2 [shape = 'f32[4,8,128]{2,1,0:T(8,128)}', space=vmem, size = 0x4000, scoped, tag = 'scratch operand']
  %s0 = inlined_call_operand.hbm [shape: f32[32,128], index: 0, kind: input, shape index: {}]
  %s1 = inlined_call_operand.hbm [shape: f32[32,128], index: 1, kind: input, shape index: {}]
  %s2 = inlined_call_operand.hbm [shape: f32[1,1], index: 2, kind: output, shape index: {}]
  %s3 = sld [smem:[#allocation0]]
  $region42: #{tpu_custom_call.1} parent=0
    _
  %s5 = ssub.s32 1, %s3
  %s6 = scalar_select 0, %s5, %s3
  $region1: #{tpu_custom_call.1} parent=0
    #allocation3 [shape = 'u8[16384]{0}', space=vmem, size = 0x4000, scoped, tag = 'input window, operand 0, single buffered']
    #allocation4 [shape = 's32[1]{0}', space=sflag, size = 0x4, scoped, tag = 'scoped memory for tpu_custom_call.1']
    #allocation5 [shape = 's32[1]{0}', space=sflag, size = 0x4, scoped, tag = 'scoped memory for tpu_custom_call.1']
    #allocation6 [shape = 'u8[16384]{0}', space=vmem, size = 0x4000, scoped, tag = 'input window, operand 1, single buffered']
    #allocation7 [shape = 's32[1]{0}', space=sflag, size = 0x4, scoped, tag = 'scoped memory for tpu_custom_call.1']
    #allocation8 [shape = 'u8[512]{0}', space=vmem, size = 0x400, scoped, tag = 'output window, operand 0, single buffered']
    %7 = vsyncpa [#allocation4], 0
    %8 = vsyncpa [#allocation7], 0
    %9 = vsyncpa [#allocation5], 0
    // Predicated region
    $region2: #{tpu_custom_call.1} parent=1 // pred_check
      _
    $region3: #{tpu_custom_call.1} parent=1 // pred_check_branch
      %11 = sbr.rel (0) target = $region5
    $region4: #{tpu_custom_call.1} parent=1 // pred_region
      %13 = vsyncadd [#allocation4], 0
      %s14 = sshll.u32 %s0, 4
      %s15 = int_to_ptr.hbm [resolvable:$true] %s14
      %s16 = sshll.u32 [#allocation3], 4
      %s17 = int_to_ptr.vmem [resolvable:$true] %s16
      %22 = dma.hbm_to_vmem [thread:$0]  %s15, 512, %s17, [#allocation4], 128, 128, 8
    $region5: #{tpu_custom_call.1} parent=1 // pred_fallthru
      _
    // Predicated region
    $region6: #{tpu_custom_call.1} parent=1 // pred_check
      _
    $region7: #{tpu_custom_call.1} parent=1 // pred_check_branch
      %24 = sbr.rel (0) target = $region9
    $region8: #{tpu_custom_call.1} parent=1 // pred_region
      %26 = vsyncadd [#allocation7], 0
      %s27 = sshll.u32 %s1, 4
      %s28 = int_to_ptr.hbm [resolvable:$true] %s27
      %s29 = sshll.u32 [#allocation6], 4
      %s30 = int_to_ptr.vmem [resolvable:$true] %s29
      %35 = dma.hbm_to_vmem [thread:$0]  %s28, 512, %s30, [#allocation7], 128, 128, 8
    $region9: #{tpu_custom_call.1} parent=1 // pred_fallthru
      _
    // Predicated region
    $region10: #{tpu_custom_call.1} parent=1 // pred_check
      _
    $region11: #{tpu_custom_call.1} parent=1 // pred_check_branch
      %37 = sbr.rel (0) target = $region13
    $region12: #{tpu_custom_call.1} parent=1 // pred_region
      %39 = dma.done [#allocation4], 512
    $region13: #{tpu_custom_call.1} parent=1 // pred_fallthru
      _
    // Predicated region
    $region14: #{tpu_custom_call.1} parent=1 // pred_check
      _
    $region15: #{tpu_custom_call.1} parent=1 // pred_check_branch
      %41 = sbr.rel (0) target = $region17
    $region16: #{tpu_custom_call.1} parent=1 // pred_region
      %43 = dma.done [#allocation7], 512
    $region17: #{tpu_custom_call.1} parent=1 // pred_fallthru
      _
    %p44 = scmp.eq.s32.totalorder 0, 0
    // Predicated region
    $region18: #{tpu_custom_call.1} parent=1 // pred_check
      %p45 = pneg %p44
    $region19: #{tpu_custom_call.1} parent=1 // pred_check_branch
      %47 = sbr.rel (%p45) target = $region21
    $region20: #{tpu_custom_call.1} parent=1 // pred_region
      %48 = vst [vmem:[#allocation2] sm:$0xff] 0.0
      %49 = vst [vmem:[#allocation2 + $0x8] sm:$0xff] 0.0
      %50 = vst [vmem:[#allocation2 + $0x10] sm:$0xff] 0.0
      %51 = vst [vmem:[#allocation2 + $0x18] sm:$0xff] 0.0
    $region21: #{tpu_custom_call.1} parent=1 // pred_fallthru
      _
    %v52 = vld [vmem:[#allocation3] sm:$0xff]
    %v53 = vld [vmem:[#allocation3 + $0x8] sm:$0xff]
    %v54 = vld [vmem:[#allocation3 + $0x10] sm:$0xff]
    %v55 = vld [vmem:[#allocation3 + $0x18] sm:$0xff]
    %v56 = vld [vmem:[#allocation6] sm:$0xff]
    %v57 = vld [vmem:[#allocation6 + $0x8] sm:$0xff]
    %v58 = vld [vmem:[#allocation6 + $0x10] sm:$0xff]
    %v59 = vld [vmem:[#allocation6 + $0x18] sm:$0xff]
    %v60 = vand.u32 2147483647, %v52
    %v61 = vand.u32 2147483647, %v53
    %v62 = vand.u32 2147483647, %v54
    %v63 = vand.u32 2147483647, %v55
    %v64 = vsub.f32 0.0, %v60
    %v65 = vsub.f32 0.0, %v61
    %v66 = vsub.f32 0.0, %v62
    %v67 = vsub.f32 0.0, %v63
    %v68 = vmul.f32 %v64, 1.442695
    %v69 = vpow.pop %v68
    %v70 = vmul.f32 %v65, 1.442695
    %v71 = vpow.pop %v70
    %v72 = vmul.f32 %v66, 1.442695
    %v73 = vpow.pop %v72
    %v74 = vmul.f32 %v67, 1.442695
    %v75 = vpow.pop %v74
    %v76 = vmax.f32 %v52, 0.0
    %v77 = vmax.f32 %v53, 0.0
    %v78 = vmax.f32 %v54, 0.0
    %v79 = vmax.f32 %v55, 0.0
    %v80 = vmul.f32 %v52, %v56
    %v81 = vmul.f32 %v53, %v57
    %v82 = vmul.f32 %v54, %v58
    %v83 = vmul.f32 %v55, %v59
    %v84 = vsub.f32 %v76, %v80
    %v85 = vsub.f32 %v77, %v81
    %v86 = vsub.f32 %v78, %v82
    %v87 = vsub.f32 %v79, %v83
    %v88 = vadd.f32 %v69, 1.0
    %v89 = vlog2.pop %v88
    %v90 = vmul.f32 %v89, 0.6931472
    %v91 = vmul.f32 -0.5, %v69
    %v92 = vadd.f32 %v91, 1.0
    %v93 = vmul.f32 %v92, %v69
    %v94 = vand.u32 2147483647, %v69
    %vm95 = vcmp.lt.f32.partialorder %v94, 0.0004427343
    %v96 = vsel %vm95, %v93, %v90
    %v97 = vadd.f32 %v71, 1.0
    %v98 = vlog2.pop %v97
    %v99 = vmul.f32 %v98, 0.6931472
    %v100 = vmul.f32 -0.5, %v71
    %v101 = vadd.f32 %v100, 1.0
    %v102 = vmul.f32 %v101, %v71
    %v103 = vand.u32 2147483647, %v71
    %vm104 = vcmp.lt.f32.partialorder %v103, 0.0004427343
    %v105 = vsel %vm104, %v102, %v99
    %v106 = vadd.f32 %v73, 1.0
    %v107 = vlog2.pop %v106
    %v108 = vmul.f32 %v107, 0.6931472
    %v109 = vmul.f32 -0.5, %v73
    %v110 = vadd.f32 %v109, 1.0
    %v111 = vmul.f32 %v110, %v73
    %v112 = vand.u32 2147483647, %v73
    %vm113 = vcmp.lt.f32.partialorder %v112, 0.0004427343
    %v114 = vsel %vm113, %v111, %v108
    %v115 = vadd.f32 %v75, 1.0
    %v116 = vlog2.pop %v115
    %v117 = vmul.f32 %v116, 0.6931472
    %v118 = vmul.f32 -0.5, %v75
    %v119 = vadd.f32 %v118, 1.0
    %v120 = vmul.f32 %v119, %v75
    %v121 = vand.u32 2147483647, %v75
    %vm122 = vcmp.lt.f32.partialorder %v121, 0.0004427343
    %v123 = vsel %vm122, %v120, %v117
    %v124 = vadd.f32 %v84, %v96
    %v125 = vadd.f32 %v85, %v105
    %v126 = vadd.f32 %v86, %v114
    %v127 = vadd.f32 %v87, %v123
    %v128 = vadd.f32 %v69, 1.0
    %v129 = vadd.f32 %v71, 1.0
    %v130 = vadd.f32 %v73, 1.0
    %v131 = vadd.f32 %v75, 1.0
    %v132 = vrcp.pop %v128
    %v133 = vrcp.pop %v129
    %v134 = vrcp.pop %v130
    %v135 = vrcp.pop %v131
    %v136 = vmul.f32 %v128, %v132
    %v137 = vmul.f32 %v129, %v133
    %v138 = vmul.f32 %v130, %v134
    %v139 = vmul.f32 %v131, %v135
    %v140 = vsub.f32 2.0, %v136
    %v141 = vsub.f32 2.0, %v137
    %v142 = vsub.f32 2.0, %v138
    %v143 = vsub.f32 2.0, %v139
    %v144 = vmul.f32 %v132, %v140
    %v145 = vmul.f32 %v133, %v141
    %v146 = vmul.f32 %v134, %v142
    %v147 = vmul.f32 %v135, %v143
    %vm148 = vcmp.ge.f32.partialorder %v52, 0.0
    %vm149 = vcmp.ge.f32.partialorder %v53, 0.0
    %vm150 = vcmp.ge.f32.partialorder %v54, 0.0
    %vm151 = vcmp.ge.f32.partialorder %v55, 0.0
    %v152 = vsub.f32 1.0, %v144
    %v153 = vsub.f32 1.0, %v145
    %v154 = vsub.f32 1.0, %v146
    %v155 = vsub.f32 1.0, %v147
    %v156 = vsel %vm148, %v144, %v152
    %v157 = vsel %vm149, %v145, %v153
    %v158 = vsel %vm150, %v146, %v154
    %v159 = vsel %vm151, %v147, %v155
    %v160 = vsub.f32 %v156, %v56
    %v161 = vsub.f32 %v157, %v57
    %v162 = vsub.f32 %v158, %v58
    %v163 = vsub.f32 %v159, %v59
    %v164 = vsub.f32 %v160, 1.0
    %v165 = vsub.f32 %v161, 1.0
    %v166 = vsub.f32 %v162, 1.0
    %v167 = vsub.f32 %v163, 1.0
    %v168 = vmul.f32 %v164, 19.96008
    %v169 = vmul.f32 %v165, 19.96008
    %v170 = vmul.f32 %v166, 19.96008
    %v171 = vmul.f32 %v167, 19.96008
    %v172 = vmul.f32 %v168, 1.442695
    %v173 = vpow.pop %v172
    %v174 = vmul.f32 %v169, 1.442695
    %v175 = vpow.pop %v174
    %v176 = vmul.f32 %v170, 1.442695
    %v177 = vpow.pop %v176
    %v178 = vmul.f32 %v171, 1.442695
    %v179 = vpow.pop %v178
    %v180 = vsub.f32 1.0, %v173
    %v181 = vsub.f32 1.0, %v175
    %v182 = vsub.f32 1.0, %v177
    %v183 = vsub.f32 1.0, %v179
    %v184 = vmul.f32 %v124, %v180
    %v185 = vmul.f32 %v125, %v181
    %v186 = vmul.f32 %v126, %v182
    %v187 = vmul.f32 %v127, %v183
    %s188 = sadd.s32 0, 1
    %s189 = smul.u32 %s188, 32
    %p190 = scmp.gt.s32.totalorder %s189, 16
    // Predicated region
    $region22: #{tpu_custom_call.1} parent=1 // pred_check
      %p191 = pneg %p190
    $region23: #{tpu_custom_call.1} parent=1 // pred_check_branch
      %193 = sbr.rel (%p191) target = $region25
    $region24: #{tpu_custom_call.1} parent=1 // pred_region
      %s194 = smul.u32 0, 32
      %v195 = vlaneseq
      %v196 = vshrl.u32 %v195, 7
      %v197 = vadd.s32 %v196, 8
      %v198 = vadd.s32 %v196, 16
      %v199 = vadd.s32 %v196, 24
      %v200 = vstv %s194
      %v201 = vadd.s32 %v200, %v196
      %v202 = vadd.s32 %v200, %v197
      %v203 = vadd.s32 %v200, %v198
      %v204 = vadd.s32 %v200, %v199
      %v205 = vlaneseq
      %v206 = vand.u32 %v205, 127
      %vm207 = vcmp.lt.s32.totalorder %v201, 16
      %vm208 = vcmp.lt.s32.totalorder %v202, 16
      %vm209 = vcmp.lt.s32.totalorder %v203, 16
      %vm210 = vcmp.lt.s32.totalorder %v204, 16
      %vm211 = vcmp.eq.s32.totalorder %v201, 16
      %vm212 = vcmp.eq.s32.totalorder %v202, 16
      %vm213 = vcmp.eq.s32.totalorder %v203, 16
      %vm214 = vcmp.eq.s32.totalorder %v204, 16
      %vm215 = vcmp.lt.s32.totalorder %v206, 0
      %vm216 = vmand %vm211, %vm215
      %vm217 = vmand %vm212, %vm215
      %vm218 = vmand %vm213, %vm215
      %vm219 = vmand %vm214, %vm215
      %vm220 = vmor %vm207, %vm216
      %vm221 = vmor %vm208, %vm217
      %vm222 = vmor %vm209, %vm218
      %vm223 = vmor %vm210, %vm219
      %v224 = vsel %vm220, %v184, 0.0
      %v225 = vsel %vm221, %v185, 0.0
      %v226 = vsel %vm222, %v186, 0.0
      %v227 = vsel %vm223, %v187, 0.0
      %v228 = vld [vmem:[#allocation2] sm:$0xff]
      %v229 = vld [vmem:[#allocation2 + $0x8] sm:$0xff]
      %v230 = vld [vmem:[#allocation2 + $0x10] sm:$0xff]
      %v231 = vld [vmem:[#allocation2 + $0x18] sm:$0xff]
      %v232 = vadd.f32 %v224, 0.0
      %v233 = vadd.f32 %v225, 0.0
      %v234 = vadd.f32 %v226, 0.0
      %v235 = vadd.f32 %v227, 0.0
      %v236 = vadd.f32 %v228, %v232
      %v237 = vadd.f32 %v229, %v233
      %v238 = vadd.f32 %v230, %v234
      %v239 = vadd.f32 %v231, %v235
      %240 = vst [vmem:[#allocation2] sm:$0xff] %v236
      %241 = vst [vmem:[#allocation2 + $0x8] sm:$0xff] %v237
      %242 = vst [vmem:[#allocation2 + $0x10] sm:$0xff] %v238
      %243 = vst [vmem:[#allocation2 + $0x18] sm:$0xff] %v239
    $region25: #{tpu_custom_call.1} parent=1 // pred_fallthru
      _
    %p244 = scmp.le.s32.totalorder %s189, 16
    // Predicated region
    $region26: #{tpu_custom_call.1} parent=1 // pred_check
      %p245 = pneg %p244
    $region27: #{tpu_custom_call.1} parent=1 // pred_check_branch
      %247 = sbr.rel (%p245) target = $region29
    $region28: #{tpu_custom_call.1} parent=1 // pred_region
      %v248 = vld [vmem:[#allocation2] sm:$0xff]
      %v249 = vld [vmem:[#allocation2 + $0x8] sm:$0xff]
      %v250 = vld [vmem:[#allocation2 + $0x10] sm:$0xff]
      %v251 = vld [vmem:[#allocation2 + $0x18] sm:$0xff]
      %v252 = vadd.f32 %v184, 0.0
      %v253 = vadd.f32 %v185, 0.0
      %v254 = vadd.f32 %v186, 0.0
      %v255 = vadd.f32 %v187, 0.0
      %v256 = vadd.f32 %v248, %v252
      %v257 = vadd.f32 %v249, %v253
      %v258 = vadd.f32 %v250, %v254
      %v259 = vadd.f32 %v251, %v255
      %260 = vst [vmem:[#allocation2] sm:$0xff] %v256
      %261 = vst [vmem:[#allocation2 + $0x8] sm:$0xff] %v257
      %262 = vst [vmem:[#allocation2 + $0x10] sm:$0xff] %v258
      %263 = vst [vmem:[#allocation2 + $0x18] sm:$0xff] %v259
    $region29: #{tpu_custom_call.1} parent=1 // pred_fallthru
      _
    // Predicated region
    $region30: #{tpu_custom_call.1} parent=1 // pred_check
      %p264 = pneg %p44
    $region31: #{tpu_custom_call.1} parent=1 // pred_check_branch
      %266 = sbr.rel (%p264) target = $region33
    $region32: #{tpu_custom_call.1} parent=1 // pred_region
      %v267 = vld [vmem:[#allocation2] sm:$0xff]
      %v268 = vld [vmem:[#allocation2 + $0x8] sm:$0xff]
      %v269 = vld [vmem:[#allocation2 + $0x10] sm:$0xff]
      %v270 = vld [vmem:[#allocation2 + $0x18] sm:$0xff]
      %v271 = vadd.f32 %v267, %v268
      %v272 = vadd.f32 %v271, %v269
      %v273 = vadd.f32 %v272, %v270
      %274 = vadd.xlane.f32.xlu0 %v273
      %v275 = vpop.xlane.xlu0 %274
      %v276 = vrot.slane %v275, 4
      %v277 = vadd.f32 %v275, %v276
      %v278 = vrot.slane %v277, 2
      %v279 = vadd.f32 %v277, %v278
      %v280 = vrot.slane %v279, 1
      %v281 = vadd.f32 %v279, %v280
      %s282 = vtos %v281
      %v283 = vstv %s282
      %vm284 = vcmask 0
      %285 = vst.msk [vmem:[#allocation8] sm:$0x1] %vm284, %v283
    $region33: #{tpu_custom_call.1} parent=1 // pred_fallthru
      _
    // Predicated region
    $region34: #{tpu_custom_call.1} parent=1 // pred_check
      _
    $region35: #{tpu_custom_call.1} parent=1 // pred_check_branch
      %287 = sbr.rel (0) target = $region37
    $region36: #{tpu_custom_call.1} parent=1 // pred_region
      %289 = vsyncadd [#allocation5], 0
      %s291 = sshll.u32 [#allocation8], 4
      %s292 = int_to_ptr.vmem [resolvable:$true] %s291
      %s293 = sshll.u32 %s2, 4
      %s294 = int_to_ptr.hbm [resolvable:$true] %s293
      %296 = dma.vmem_to_hbm [thread:$0]  %s292, 16, %s294, [#allocation5]
    $region37: #{tpu_custom_call.1} parent=1 // pred_fallthru
      _
    // Predicated region
    $region38: #{tpu_custom_call.1} parent=1 // pred_check
      _
    $region39: #{tpu_custom_call.1} parent=1 // pred_check_branch
      %298 = sbr.rel (0) target = $region41
    $region40: #{tpu_custom_call.1} parent=1 // pred_region
      %300 = dma.done [#allocation5], 16
    $region41: #{tpu_custom_call.1} parent=1 // pred_fallthru
      _
    %301 = vsyncpa [#allocation4], 1
    %302 = vsyncpa [#allocation7], 1
    %303 = vsyncpa [#allocation5], 1

</llo_original>
